<compile_context>
chip_gen: v6e
topology: v6e:2x2x1
jax: 0.10.0
libtpu: 0.0.40
codegen_flags: <defaults>
</compile_context>

<pallas_src>
import math

import jax
import jax.numpy as jnp
from jax import lax
from jax.experimental import pallas as pl
from jax.experimental.pallas import tpu as pltpu

INPUT_DIM = 106
HIDDEN_DIM = 32
OUTPUT_DIM = 1
NUM_LAYERS = 10


def _round_up(n, m):
    return ((n + m - 1) // m) * m


def _mlp_kernel(x_ref, w1_ref, wh_ref, w10t_ref, b_ref, out_ref):
    # x_ref    : (block_b, INPUT_DIM)   -- natural (batch, feature) layout
    # w1_ref   : (HIDDEN_DIM, INPUT_DIM)
    # wh_ref   : (8, HIDDEN_DIM, HIDDEN_DIM)
    # w10t_ref : (HIDDEN_DIM, 1)        -- layer-10 weight as a column
    # b_ref    : (NUM_LAYERS, HIDDEN_DIM, 1); layer-10 bias stored at b_ref[9, 0, 0]
    # out_ref  : (1, block_b)           -- lane-dense output row

    # Layer 1: contract the feature axis of both operands so the result is already
    # feature-major (HIDDEN_DIM, block_b); no in-kernel data transpose of x needed.
    h = lax.dot_general(
        w1_ref[...], x_ref[...],
        dimension_numbers=(((1,), (1,)), ((), ())),
        preferred_element_type=jnp.float32)
    h = jnp.maximum(h + b_ref[0], 0.0)

    # Layers 2..9: feature-major W @ h on the MXU (batch along lanes).
    for j in range(8):
        h = jnp.dot(wh_ref[j], h, preferred_element_type=jnp.float32)
        h = jnp.maximum(h + b_ref[j + 1], 0.0)

    # Layer 10 (out_dim == 1): VPU multiply + sublane reduction (XLU slot) instead of
    # an M=1 MXU dot that would still stream all block_b columns through the MXU.
    z = jnp.sum(w10t_ref[...] * h, axis=0, keepdims=True)        # (1, block_b)
    z = z + b_ref[9][0:1, 0:1]                                    # scalar layer-10 bias
    out_ref[...] = jax.nn.sigmoid(z).astype(out_ref.dtype)


def mlp_forward(x, params, *, block_b=4096):
    """x: (B, INPUT_DIM) float32. params = (w1, w_hidden, w10_col, b_stack)."""
    w1, wh, w10t, b = params
    B = x.shape[0]
    x = x.astype(jnp.float32)

    # Batch block: multiple of 128 lanes, capped so tiny batches don't over-pad.
    block = min(_round_up(block_b, 128), _round_up(B, 128))
    Bp = _round_up(B, block)
    # Keep >= 2 grid steps when the batch allows it so v7x's two TensorCores both
    # get work (the single "parallel" grid axis is what shards across TCs).
    if Bp // block < 2 and Bp >= 256:
        block = max(128, _round_up(Bp // 2, 128))
        Bp = _round_up(B, block)
    grid = (Bp // block,)

    if Bp != B:
        # Cheap zero pad on the batch axis only (no transpose / re-layout pass).
        x = jnp.pad(x, ((0, Bp - B), (0, 0)))

    flops = 2 * Bp * (INPUT_DIM * HIDDEN_DIM
                      + 8 * HIDDEN_DIM * HIDDEN_DIM
                      + HIDDEN_DIM * OUTPUT_DIM)
    bytes_accessed = 4 * (INPUT_DIM * Bp + Bp
                          + w1.size + wh.size + w10t.size + b.size)

    # NOTE: at block<=4096 the f32 x tile is <=1.7 MiB (double-buffered ~3.5 MiB),
    # well under the default scoped-VMEM limit on all generations, so no
    # vmem_limit_bytes override is needed. Raise it only if block_b >= 8192 on v5e.
    out = pl.pallas_call(
        _mlp_kernel,
        out_shape=jax.ShapeDtypeStruct((1, Bp), jnp.float32),
        grid_spec=pltpu.PrefetchScalarGridSpec(
            num_scalar_prefetch=0,
            grid=grid,
            in_specs=[
                pl.BlockSpec((block, INPUT_DIM), lambda i: (i, 0)),   # x (tiled)
                pl.BlockSpec(w1.shape, lambda i: (0, 0)),             # resident
                pl.BlockSpec(wh.shape, lambda i: (0, 0, 0)),          # resident
                pl.BlockSpec(w10t.shape, lambda i: (0, 0)),           # resident
                pl.BlockSpec(b.shape, lambda i: (0, 0, 0)),           # resident
            ],
            out_specs=pl.BlockSpec((1, block), lambda i: (0, i)),     # lane-dense
        ),
        compiler_params=pltpu.CompilerParams(
            dimension_semantics=("parallel",),
        ),
        cost_estimate=pl.CostEstimate(
            flops=flops, transcendentals=Bp, bytes_accessed=bytes_accessed),
    )(x, w1, wh, w10t, b)

    return out[0, :B].reshape(B, OUTPUT_DIM)


def init_params(key, input_dim=INPUT_DIM, hidden_dim=HIDDEN_DIM,
                output_dim=OUTPUT_DIM):
    """Deterministic init mirroring the PyTorch module's shapes/distributions.

    Layers 1-9: kaiming_uniform_ (nonlinearity='relu') weights; biases keep the
    nn.Linear default U(-1/sqrt(fan_in), 1/sqrt(fan_in)).
    Layer 10: default nn.Linear init for weight and bias.
    Hidden weights stay in PyTorch (out, in) layout; the layer-10 weight is passed
    to the kernel as a (hidden_dim, 1) column for the VPU+XLU reduction.
    """
    dims = [input_dim] + [hidden_dim] * 9 + [output_dim]
    ws, bs = [], []
    for li in range(NUM_LAYERS):
        fan_in, fan_out = dims[li], dims[li + 1]
        key, kw, kb = jax.random.split(key, 3)
        if li < 9:
            bound_w = math.sqrt(6.0 / fan_in)       # kaiming_uniform_, relu gain
        else:
            bound_w = 1.0 / math.sqrt(fan_in)       # default nn.Linear weight init
        w = jax.random.uniform(kw, (fan_out, fan_in), jnp.float32,
                               minval=-bound_w, maxval=bound_w)
        bound_b = 1.0 / math.sqrt(fan_in)
        bvec = jax.random.uniform(kb, (fan_out,), jnp.float32,
                                  minval=-bound_b, maxval=bound_b)
        ws.append(w)
        bs.append(bvec)

    # Pack into the 4 kernel operands.
    w1 = ws[0]                                    # (32, 106)
    wh = jnp.stack(ws[1:9], axis=0)               # (8, 32, 32)
    w10t = ws[9].T                                # (32, 1)  -- column layout
    b_stack = jnp.zeros((NUM_LAYERS, hidden_dim, 1), jnp.float32)
    for li in range(9):
        b_stack = b_stack.at[li, :, 0].set(bs[li])
    b_stack = b_stack.at[9, 0, 0].set(bs[9][0])   # layer-10 bias padded in
    return (w1, wh, w10t, b_stack), (ws, bs)


def reference_forward(x, ws, bs):
    h = x
    for i in range(9):
        h = jnp.maximum(h @ ws[i].T + bs[i], 0.0)
    return jax.nn.sigmoid(h @ ws[9].T + bs[9])


if __name__ == "__main__":
    key = jax.random.PRNGKey(0)
    key, kx = jax.random.split(key)

    B = 8  # small demo batch; wrapper pads to a single 128-lane block internally
    x = jax.random.normal(kx, (B, INPUT_DIM), jnp.float32)

    params, (ws, bs) = init_params(key)

    out = jax.block_until_ready(mlp_forward(x, params, block_b=4096))
    ref = reference_forward(x, ws, bs)

    assert out.shape == (B, OUTPUT_DIM)
    assert jnp.allclose(out, ref, atol=1e-4, rtol=1e-4), "mismatch vs. JAX reference"

    print("KERNEL_OK")
</pallas_src>

<mosaic_0001>
module attributes {stable_mosaic.version = 11 : i64} {
  func.func @_mlp_kernel(%arg0: i32, %arg1: memref<128x106xf32, #tpu.memory_space<vmem>>, %arg2: memref<32x106xf32, #tpu.memory_space<vmem>>, %arg3: memref<8x32x32xf32, #tpu.memory_space<vmem>>, %arg4: memref<32x1xf32, #tpu.memory_space<vmem>>, %arg5: memref<10x32x1xf32, #tpu.memory_space<vmem>>, %arg6: memref<1x128xf32, #tpu.memory_space<vmem>>) attributes {dimension_semantics = [#tpu.dimension_semantics<parallel>], iteration_bounds = array<i64: 1>, scalar_prefetch = 0 : i64, scratch_operands = 0 : i64, tpu.core_type = #tpu.core_type<tc>, window_params = [{transform_indices = @transform_0, window_bounds = array<i64: 128, 106>}, {pipeline_mode = #tpu.pipeline_mode<synchronous>, transform_indices = @transform_1, window_bounds = array<i64: 32, 106>}, {pipeline_mode = #tpu.pipeline_mode<synchronous>, transform_indices = @transform_2, window_bounds = array<i64: 8, 32, 32>}, {pipeline_mode = #tpu.pipeline_mode<synchronous>, transform_indices = @transform_3, window_bounds = array<i64: 32, 1>}, {pipeline_mode = #tpu.pipeline_mode<synchronous>, transform_indices = @transform_4, window_bounds = array<i64: 10, 32, 1>}, {transform_indices = @transform_5, window_bounds = array<i64: 1, 128>}]} {
    %c0 = arith.constant 0 : index
    %c0_0 = arith.constant 0 : index
    %0 = vector.load %arg2[%c0, %c0_0] : memref<32x106xf32, #tpu.memory_space<vmem>>, vector<32x106xf32>
    %c0_1 = arith.constant 0 : index
    %c0_2 = arith.constant 0 : index
    %1 = vector.load %arg1[%c0_1, %c0_2] : memref<128x106xf32, #tpu.memory_space<vmem>>, vector<128x106xf32>
    %cst = arith.constant dense<0.000000e+00> : vector<32x128xf32>
    %2 = tpu.matmul %0, %1, %cst {dimension_numbers = #tpu.dot_dimension_numbers<[1], [1], [0], [0], [0, 0, 1, 0], [], []>} : vector<32x106xf32>, vector<128x106xf32>, vector<32x128xf32> -> vector<32x128xf32>
    %c0_3 = arith.constant 0 : index
    %c0_4 = arith.constant 0 : index
    %c0_5 = arith.constant 0 : index
    %3 = vector.load %arg5[%c0_3, %c0_4, %c0_5] : memref<10x32x1xf32, #tpu.memory_space<vmem>>, vector<1x32x1xf32>
    %4 = vector.shape_cast %3 : vector<1x32x1xf32> to vector<32x1xf32>
    %5 = vector.broadcast %4 : vector<32x1xf32> to vector<32x128xf32>
    %6 = arith.addf %2, %5 : vector<32x128xf32>
    %cst_6 = arith.constant 0.000000e+00 : f32
    %7 = vector.broadcast %cst_6 : f32 to vector<32x128xf32>
    %8 = arith.maximumf %6, %7 : vector<32x128xf32>
    %c0_7 = arith.constant 0 : index
    %c0_8 = arith.constant 0 : index
    %c0_9 = arith.constant 0 : index
    %9 = vector.load %arg3[%c0_7, %c0_8, %c0_9] : memref<8x32x32xf32, #tpu.memory_space<vmem>>, vector<1x32x32xf32>
    %10 = vector.shape_cast %9 : vector<1x32x32xf32> to vector<32x32xf32>
    %cst_10 = arith.constant dense<0.000000e+00> : vector<32x128xf32>
    %11 = tpu.matmul %10, %8, %cst_10 {dimension_numbers = #tpu.dot_dimension_numbers<[1], [0], [0], [1], [0, 0, 1, 1], [], []>} : vector<32x32xf32>, vector<32x128xf32>, vector<32x128xf32> -> vector<32x128xf32>
    %c1 = arith.constant 1 : index
    %c0_11 = arith.constant 0 : index
    %c0_12 = arith.constant 0 : index
    %12 = vector.load %arg5[%c1, %c0_11, %c0_12] : memref<10x32x1xf32, #tpu.memory_space<vmem>>, vector<1x32x1xf32>
    %13 = vector.shape_cast %12 : vector<1x32x1xf32> to vector<32x1xf32>
    %14 = vector.broadcast %13 : vector<32x1xf32> to vector<32x128xf32>
    %15 = arith.addf %11, %14 : vector<32x128xf32>
    %cst_13 = arith.constant 0.000000e+00 : f32
    %16 = vector.broadcast %cst_13 : f32 to vector<32x128xf32>
    %17 = arith.maximumf %15, %16 : vector<32x128xf32>
    %c1_14 = arith.constant 1 : index
    %c0_15 = arith.constant 0 : index
    %c0_16 = arith.constant 0 : index
    %18 = vector.load %arg3[%c1_14, %c0_15, %c0_16] : memref<8x32x32xf32, #tpu.memory_space<vmem>>, vector<1x32x32xf32>
    %19 = vector.shape_cast %18 : vector<1x32x32xf32> to vector<32x32xf32>
    %cst_17 = arith.constant dense<0.000000e+00> : vector<32x128xf32>
    %20 = tpu.matmul %19, %17, %cst_17 {dimension_numbers = #tpu.dot_dimension_numbers<[1], [0], [0], [1], [0, 0, 1, 1], [], []>} : vector<32x32xf32>, vector<32x128xf32>, vector<32x128xf32> -> vector<32x128xf32>
    %c2 = arith.constant 2 : index
    %c0_18 = arith.constant 0 : index
    %c0_19 = arith.constant 0 : index
    %21 = vector.load %arg5[%c2, %c0_18, %c0_19] : memref<10x32x1xf32, #tpu.memory_space<vmem>>, vector<1x32x1xf32>
    %22 = vector.shape_cast %21 : vector<1x32x1xf32> to vector<32x1xf32>
    %23 = vector.broadcast %22 : vector<32x1xf32> to vector<32x128xf32>
    %24 = arith.addf %20, %23 : vector<32x128xf32>
    %cst_20 = arith.constant 0.000000e+00 : f32
    %25 = vector.broadcast %cst_20 : f32 to vector<32x128xf32>
    %26 = arith.maximumf %24, %25 : vector<32x128xf32>
    %c2_21 = arith.constant 2 : index
    %c0_22 = arith.constant 0 : index
    %c0_23 = arith.constant 0 : index
    %27 = vector.load %arg3[%c2_21, %c0_22, %c0_23] : memref<8x32x32xf32, #tpu.memory_space<vmem>>, vector<1x32x32xf32>
    %28 = vector.shape_cast %27 : vector<1x32x32xf32> to vector<32x32xf32>
    %cst_24 = arith.constant dense<0.000000e+00> : vector<32x128xf32>
    %29 = tpu.matmul %28, %26, %cst_24 {dimension_numbers = #tpu.dot_dimension_numbers<[1], [0], [0], [1], [0, 0, 1, 1], [], []>} : vector<32x32xf32>, vector<32x128xf32>, vector<32x128xf32> -> vector<32x128xf32>
    %c3 = arith.constant 3 : index
    %c0_25 = arith.constant 0 : index
    %c0_26 = arith.constant 0 : index
    %30 = vector.load %arg5[%c3, %c0_25, %c0_26] : memref<10x32x1xf32, #tpu.memory_space<vmem>>, vector<1x32x1xf32>
    %31 = vector.shape_cast %30 : vector<1x32x1xf32> to vector<32x1xf32>
    %32 = vector.broadcast %31 : vector<32x1xf32> to vector<32x128xf32>
    %33 = arith.addf %29, %32 : vector<32x128xf32>
    %cst_27 = arith.constant 0.000000e+00 : f32
    %34 = vector.broadcast %cst_27 : f32 to vector<32x128xf32>
    %35 = arith.maximumf %33, %34 : vector<32x128xf32>
    %c3_28 = arith.constant 3 : index
    %c0_29 = arith.constant 0 : index
    %c0_30 = arith.constant 0 : index
    %36 = vector.load %arg3[%c3_28, %c0_29, %c0_30] : memref<8x32x32xf32, #tpu.memory_space<vmem>>, vector<1x32x32xf32>
    %37 = vector.shape_cast %36 : vector<1x32x32xf32> to vector<32x32xf32>
    %cst_31 = arith.constant dense<0.000000e+00> : vector<32x128xf32>
    %38 = tpu.matmul %37, %35, %cst_31 {dimension_numbers = #tpu.dot_dimension_numbers<[1], [0], [0], [1], [0, 0, 1, 1], [], []>} : vector<32x32xf32>, vector<32x128xf32>, vector<32x128xf32> -> vector<32x128xf32>
    %c4 = arith.constant 4 : index
    %c0_32 = arith.constant 0 : index
    %c0_33 = arith.constant 0 : index
    %39 = vector.load %arg5[%c4, %c0_32, %c0_33] : memref<10x32x1xf32, #tpu.memory_space<vmem>>, vector<1x32x1xf32>
    %40 = vector.shape_cast %39 : vector<1x32x1xf32> to vector<32x1xf32>
    %41 = vector.broadcast %40 : vector<32x1xf32> to vector<32x128xf32>
    %42 = arith.addf %38, %41 : vector<32x128xf32>
    %cst_34 = arith.constant 0.000000e+00 : f32
    %43 = vector.broadcast %cst_34 : f32 to vector<32x128xf32>
    %44 = arith.maximumf %42, %43 : vector<32x128xf32>
    %c4_35 = arith.constant 4 : index
    %c0_36 = arith.constant 0 : index
    %c0_37 = arith.constant 0 : index
    %45 = vector.load %arg3[%c4_35, %c0_36, %c0_37] : memref<8x32x32xf32, #tpu.memory_space<vmem>>, vector<1x32x32xf32>
    %46 = vector.shape_cast %45 : vector<1x32x32xf32> to vector<32x32xf32>
    %cst_38 = arith.constant dense<0.000000e+00> : vector<32x128xf32>
    %47 = tpu.matmul %46, %44, %cst_38 {dimension_numbers = #tpu.dot_dimension_numbers<[1], [0], [0], [1], [0, 0, 1, 1], [], []>} : vector<32x32xf32>, vector<32x128xf32>, vector<32x128xf32> -> vector<32x128xf32>
    %c5 = arith.constant 5 : index
    %c0_39 = arith.constant 0 : index
    %c0_40 = arith.constant 0 : index
    %48 = vector.load %arg5[%c5, %c0_39, %c0_40] : memref<10x32x1xf32, #tpu.memory_space<vmem>>, vector<1x32x1xf32>
    %49 = vector.shape_cast %48 : vector<1x32x1xf32> to vector<32x1xf32>
    %50 = vector.broadcast %49 : vector<32x1xf32> to vector<32x128xf32>
    %51 = arith.addf %47, %50 : vector<32x128xf32>
    %cst_41 = arith.constant 0.000000e+00 : f32
    %52 = vector.broadcast %cst_41 : f32 to vector<32x128xf32>
    %53 = arith.maximumf %51, %52 : vector<32x128xf32>
    %c5_42 = arith.constant 5 : index
    %c0_43 = arith.constant 0 : index
    %c0_44 = arith.constant 0 : index
    %54 = vector.load %arg3[%c5_42, %c0_43, %c0_44] : memref<8x32x32xf32, #tpu.memory_space<vmem>>, vector<1x32x32xf32>
    %55 = vector.shape_cast %54 : vector<1x32x32xf32> to vector<32x32xf32>
    %cst_45 = arith.constant dense<0.000000e+00> : vector<32x128xf32>
    %56 = tpu.matmul %55, %53, %cst_45 {dimension_numbers = #tpu.dot_dimension_numbers<[1], [0], [0], [1], [0, 0, 1, 1], [], []>} : vector<32x32xf32>, vector<32x128xf32>, vector<32x128xf32> -> vector<32x128xf32>
    %c6 = arith.constant 6 : index
    %c0_46 = arith.constant 0 : index
    %c0_47 = arith.constant 0 : index
    %57 = vector.load %arg5[%c6, %c0_46, %c0_47] : memref<10x32x1xf32, #tpu.memory_space<vmem>>, vector<1x32x1xf32>
    %58 = vector.shape_cast %57 : vector<1x32x1xf32> to vector<32x1xf32>
    %59 = vector.broadcast %58 : vector<32x1xf32> to vector<32x128xf32>
    %60 = arith.addf %56, %59 : vector<32x128xf32>
    %cst_48 = arith.constant 0.000000e+00 : f32
    %61 = vector.broadcast %cst_48 : f32 to vector<32x128xf32>
    %62 = arith.maximumf %60, %61 : vector<32x128xf32>
    %c6_49 = arith.constant 6 : index
    %c0_50 = arith.constant 0 : index
    %c0_51 = arith.constant 0 : index
    %63 = vector.load %arg3[%c6_49, %c0_50, %c0_51] : memref<8x32x32xf32, #tpu.memory_space<vmem>>, vector<1x32x32xf32>
    %64 = vector.shape_cast %63 : vector<1x32x32xf32> to vector<32x32xf32>
    %cst_52 = arith.constant dense<0.000000e+00> : vector<32x128xf32>
    %65 = tpu.matmul %64, %62, %cst_52 {dimension_numbers = #tpu.dot_dimension_numbers<[1], [0], [0], [1], [0, 0, 1, 1], [], []>} : vector<32x32xf32>, vector<32x128xf32>, vector<32x128xf32> -> vector<32x128xf32>
    %c7 = arith.constant 7 : index
    %c0_53 = arith.constant 0 : index
    %c0_54 = arith.constant 0 : index
    %66 = vector.load %arg5[%c7, %c0_53, %c0_54] : memref<10x32x1xf32, #tpu.memory_space<vmem>>, vector<1x32x1xf32>
    %67 = vector.shape_cast %66 : vector<1x32x1xf32> to vector<32x1xf32>
    %68 = vector.broadcast %67 : vector<32x1xf32> to vector<32x128xf32>
    %69 = arith.addf %65, %68 : vector<32x128xf32>
    %cst_55 = arith.constant 0.000000e+00 : f32
    %70 = vector.broadcast %cst_55 : f32 to vector<32x128xf32>
    %71 = arith.maximumf %69, %70 : vector<32x128xf32>
    %c7_56 = arith.constant 7 : index
    %c0_57 = arith.constant 0 : index
    %c0_58 = arith.constant 0 : index
    %72 = vector.load %arg3[%c7_56, %c0_57, %c0_58] : memref<8x32x32xf32, #tpu.memory_space<vmem>>, vector<1x32x32xf32>
    %73 = vector.shape_cast %72 : vector<1x32x32xf32> to vector<32x32xf32>
    %cst_59 = arith.constant dense<0.000000e+00> : vector<32x128xf32>
    %74 = tpu.matmul %73, %71, %cst_59 {dimension_numbers = #tpu.dot_dimension_numbers<[1], [0], [0], [1], [0, 0, 1, 1], [], []>} : vector<32x32xf32>, vector<32x128xf32>, vector<32x128xf32> -> vector<32x128xf32>
    %c8 = arith.constant 8 : index
    %c0_60 = arith.constant 0 : index
    %c0_61 = arith.constant 0 : index
    %75 = vector.load %arg5[%c8, %c0_60, %c0_61] : memref<10x32x1xf32, #tpu.memory_space<vmem>>, vector<1x32x1xf32>
    %76 = vector.shape_cast %75 : vector<1x32x1xf32> to vector<32x1xf32>
    %77 = vector.broadcast %76 : vector<32x1xf32> to vector<32x128xf32>
    %78 = arith.addf %74, %77 : vector<32x128xf32>
    %cst_62 = arith.constant 0.000000e+00 : f32
    %79 = vector.broadcast %cst_62 : f32 to vector<32x128xf32>
    %80 = arith.maximumf %78, %79 : vector<32x128xf32>
    %c0_63 = arith.constant 0 : index
    %c0_64 = arith.constant 0 : index
    %81 = vector.load %arg4[%c0_63, %c0_64] : memref<32x1xf32, #tpu.memory_space<vmem>>, vector<32x1xf32>
    %82 = vector.broadcast %81 : vector<32x1xf32> to vector<32x128xf32>
    %83 = arith.mulf %82, %80 : vector<32x128xf32>
    %cst_65 = arith.constant dense<0.000000e+00> : vector<128xf32>
    %84 = vector.multi_reduction <add>, %83, %cst_65 [0] : vector<32x128xf32> to vector<128xf32>
    %85 = vector.shape_cast %84 : vector<128xf32> to vector<1x128xf32>
    %c9 = arith.constant 9 : index
    %c0_66 = arith.constant 0 : index
    %c0_67 = arith.constant 0 : index
    %86 = vector.load %arg5[%c9, %c0_66, %c0_67] : memref<10x32x1xf32, #tpu.memory_space<vmem>>, vector<1x32x1xf32>
    %87 = vector.shape_cast %86 : vector<1x32x1xf32> to vector<32x1xf32>
    %88 = vector.extract_strided_slice %87 {offsets = [0, 0], sizes = [1, 1], strides = [1, 1]} : vector<32x1xf32> to vector<1x1xf32>
    %89 = vector.broadcast %88 : vector<1x1xf32> to vector<1x128xf32>
    %90 = arith.addf %85, %89 : vector<1x128xf32>
    %91 = arith.negf %90 : vector<1x128xf32>
    %92 = math.exp %91 : vector<1x128xf32>
    %cst_68 = arith.constant 1.000000e+00 : f32
    %93 = vector.broadcast %cst_68 : f32 to vector<1x128xf32>
    %94 = arith.addf %93, %92 : vector<1x128xf32>
    %95 = arith.divf %93, %94 : vector<1x128xf32>
    %c0_69 = arith.constant 0 : index
    %c0_70 = arith.constant 0 : index
    %96 = vector.load %arg6[%c0_69, %c0_70] : memref<1x128xf32, #tpu.memory_space<vmem>>, vector<1x128xf32>
    tpu.vector_store %arg6[%c0_69, %c0_70], %95 {strides = array<i32>} : memref<1x128xf32, #tpu.memory_space<vmem>>, vector<1x128xf32>,
    return
  }
  func.func @transform_0(%arg0: i32) -> (i32, i32) {
    %c0_i32 = arith.constant 0 : i32
    %c0_i32_0 = arith.constant 0 : i32
    return %arg0, %c0_i32 : i32, i32
  }
  func.func @transform_1(%arg0: i32) -> (i32, i32) {
    %c0_i32 = arith.constant 0 : i32
    %c0_i32_0 = arith.constant 0 : i32
    %c0_i32_1 = arith.constant 0 : i32
    return %c0_i32, %c0_i32_0 : i32, i32
  }
  func.func @transform_2(%arg0: i32) -> (i32, i32, i32) {
    %c0_i32 = arith.constant 0 : i32
    %c0_i32_0 = arith.constant 0 : i32
    %c0_i32_1 = arith.constant 0 : i32
    %c0_i32_2 = arith.constant 0 : i32
    return %c0_i32, %c0_i32_0, %c0_i32_1 : i32, i32, i32
  }
  func.func @transform_3(%arg0: i32) -> (i32, i32) {
    %c0_i32 = arith.constant 0 : i32
    %c0_i32_0 = arith.constant 0 : i32
    %c0_i32_1 = arith.constant 0 : i32
    return %c0_i32, %c0_i32_0 : i32, i32
  }
  func.func @transform_4(%arg0: i32) -> (i32, i32, i32) {
    %c0_i32 = arith.constant 0 : i32
    %c0_i32_0 = arith.constant 0 : i32
    %c0_i32_1 = arith.constant 0 : i32
    %c0_i32_2 = arith.constant 0 : i32
    return %c0_i32, %c0_i32_0, %c0_i32_1 : i32, i32, i32
  }
  func.func @transform_5(%arg0: i32) -> (i32, i32) {
    %c0_i32 = arith.constant 0 : i32
    %c0_i32_0 = arith.constant 0 : i32
    return %c0_i32, %arg0 : i32, i32
  }
}

</mosaic_0001>

<llo_original>
// kernel: tpu_custom_call.1
$region0: #{tpu_custom_call.1}
  #allocation0 [shape = 'u32[]', space=smem, size = 0x4, offset = 0x4, fixed_abs, tag = 'smem constant byte address 0x4 - core index']
  #allocation1 [shape = 'u32[144,128]{1,0:T(1,128)}', space=vmem, size = 0x12000, scoped, tag = 'internal scratch']
  %s0 = inlined_call_operand.vmem [shape: f32[128,106], index: 0, kind: input, shape index: {}]
  %s1 = inlined_call_operand.vmem [shape: f32[32,106], index: 1, kind: input, shape index: {}]
  %s2 = inlined_call_operand.vmem [shape: f32[8,32,32], index: 2, kind: input, shape index: {}]
  %s3 = inlined_call_operand.vmem [shape: f32[32,1], index: 3, kind: input, shape index: {}]
  %s4 = inlined_call_operand.vmem [shape: f32[10,32,1], index: 4, kind: input, shape index: {}]
  %s5 = inlined_call_operand.hbm [shape: f32[1,128], index: 5, kind: output, shape index: {}]
  %s6 = sld [smem:[#allocation0]]
  $region30: #{tpu_custom_call.1} parent=0
    _
  %s8 = ssub.s32 1, %s6
  %s9 = scalar_select 0, %s8, %s6
  $region1: #{tpu_custom_call.1} parent=0
    #allocation2 [shape = 'u8[512]{0}', space=vmem, size = 0x400, scoped, tag = 'output window, operand 0, single buffered']
    #allocation3 [shape = 's32[1]{0}', space=sflag, size = 0x4, scoped, tag = 'scoped memory for tpu_custom_call.1']
    %10 = vsyncpa [#allocation3], 0
    // Predicated region
    $region2: #{tpu_custom_call.1} parent=1 // pred_check
      _
    $region3: #{tpu_custom_call.1} parent=1 // pred_check_branch
      %12 = sbr.rel (0) target = $region5
    $region4: #{tpu_custom_call.1} parent=1 // pred_region
      _
    $region5: #{tpu_custom_call.1} parent=1 // pred_fallthru
      _
    // Predicated region
    $region6: #{tpu_custom_call.1} parent=1 // pred_check
      _
    $region7: #{tpu_custom_call.1} parent=1 // pred_check_branch
      %14 = sbr.rel (0) target = $region9
    $region8: #{tpu_custom_call.1} parent=1 // pred_region
      _
    $region9: #{tpu_custom_call.1} parent=1 // pred_fallthru
      _
    // Predicated region
    $region10: #{tpu_custom_call.1} parent=1 // pred_check
      _
    $region11: #{tpu_custom_call.1} parent=1 // pred_check_branch
      %16 = sbr.rel (0) target = $region13
    $region12: #{tpu_custom_call.1} parent=1 // pred_region
      _
    $region13: #{tpu_custom_call.1} parent=1 // pred_fallthru
      _
    // Predicated region
    $region14: #{tpu_custom_call.1} parent=1 // pred_check
      _
    $region15: #{tpu_custom_call.1} parent=1 // pred_check_branch
      %18 = sbr.rel (0) target = $region17
    $region16: #{tpu_custom_call.1} parent=1 // pred_region
      _
    $region17: #{tpu_custom_call.1} parent=1 // pred_fallthru
      _
    // Predicated region
    $region18: #{tpu_custom_call.1} parent=1 // pred_check
      _
    $region19: #{tpu_custom_call.1} parent=1 // pred_check_branch
      %20 = sbr.rel (0) target = $region21
    $region20: #{tpu_custom_call.1} parent=1 // pred_region
      _
    $region21: #{tpu_custom_call.1} parent=1 // pred_fallthru
      _
    %v21 = vld [vmem:[%s1] sm:$0xff]
    %v22 = vld [vmem:[%s1 + $0x8] sm:$0xff]
    %v23 = vld [vmem:[%s1 + $0x10] sm:$0xff]
    %v24 = vld [vmem:[%s1 + $0x18] sm:$0xff]
    %v25 = vld [vmem:[%s0] sm:$0xff]
    %v26 = vld [vmem:[%s0 + $0x8] sm:$0xff]
    %v27 = vld [vmem:[%s0 + $0x10] sm:$0xff]
    %v28 = vld [vmem:[%s0 + $0x18] sm:$0xff]
    %v29 = vld [vmem:[%s0 + $0x20] sm:$0xff]
    %v30 = vld [vmem:[%s0 + $0x28] sm:$0xff]
    %v31 = vld [vmem:[%s0 + $0x30] sm:$0xff]
    %v32 = vld [vmem:[%s0 + $0x38] sm:$0xff]
    %v33 = vld [vmem:[%s0 + $0x40] sm:$0xff]
    %v34 = vld [vmem:[%s0 + $0x48] sm:$0xff]
    %v35 = vld [vmem:[%s0 + $0x50] sm:$0xff]
    %v36 = vld [vmem:[%s0 + $0x58] sm:$0xff]
    %v37 = vld [vmem:[%s0 + $0x60] sm:$0xff]
    %v38 = vld [vmem:[%s0 + $0x68] sm:$0xff]
    %v39 = vld [vmem:[%s0 + $0x70] sm:$0xff]
    %v40 = vld [vmem:[%s0 + $0x78] sm:$0xff]
    %v41 = vld [vmem:[%s4] sm:$0xff]
    %v42 = vld [vmem:[%s4 + $0x8] sm:$0xff]
    %v43 = vld [vmem:[%s4 + $0x10] sm:$0xff]
    %v44 = vld [vmem:[%s4 + $0x18] sm:$0xff]
    %46 = vset.pattern.permute.xlu0 0
    %47 = vperm.xlu0 %46, %v41
    %v48 = vpop.permute.xlu0 %47
    %51 = vset.pattern.permute.xlu0 0
    %52 = vperm.xlu0 %51, %v42
    %v53 = vpop.permute.xlu0 %52
    %56 = vset.pattern.permute.xlu0 0
    %57 = vperm.xlu0 %56, %v43
    %v58 = vpop.permute.xlu0 %57
    %61 = vset.pattern.permute.xlu0 0
    %62 = vperm.xlu0 %61, %v44
    %v63 = vpop.permute.xlu0 %62
    %vm65 = vcmask 867328
    %v67 = vsel %vm65, %v21, 0
    %v70 = vsel %vm65, %v22, 0
    %v73 = vsel %vm65, %v23, 0
    %v76 = vsel %vm65, %v24, 0
    %v79 = vsel %vm65, %v25, 0
    %v82 = vsel %vm65, %v26, 0
    %v85 = vsel %vm65, %v27, 0
    %v88 = vsel %vm65, %v28, 0
    %v91 = vsel %vm65, %v29, 0
    %v94 = vsel %vm65, %v30, 0
    %v97 = vsel %vm65, %v31, 0
    %v100 = vsel %vm65, %v32, 0
    %v103 = vsel %vm65, %v33, 0
    %v106 = vsel %vm65, %v34, 0
    %v109 = vsel %vm65, %v35, 0
    %v112 = vsel %vm65, %v36, 0
    %v115 = vsel %vm65, %v37, 0
    %v118 = vsel %vm65, %v38, 0
    %v121 = vsel %vm65, %v39, 0
    %v124 = vsel %vm65, %v40, 0
    %126 = vmatprep.subr.mxu0 0.0
    %127 = vmatpush1.xpose.msra.mxu0 %v124
    %128 = vmatprep.subr.mxu0 0.0
    %129 = vmatpush1.xpose.msra.mxu0 %v121
    %130 = vmatprep.subr.mxu0 0.0
    %131 = vmatpush1.xpose.msra.mxu0 %v118
    %132 = vmatprep.subr.mxu0 0.0
    %133 = vmatpush1.xpose.msra.mxu0 %v115
    %134 = vmatprep.subr.mxu0 0.0
    %135 = vmatpush1.xpose.msra.mxu0 %v112
    %136 = vmatprep.subr.mxu0 0.0
    %137 = vmatpush1.xpose.msra.mxu0 %v109
    %138 = vmatprep.subr.mxu0 0.0
    %139 = vmatpush1.xpose.msra.mxu0 %v106
    %140 = vmatprep.subr.mxu0 0.0
    %141 = vmatpush1.xpose.msra.mxu0 %v103
    %142 = vmatprep.subr.mxu0 0.0
    %143 = vmatpush1.xpose.msra.mxu0 %v100
    %144 = vmatprep.subr.mxu0 0.0
    %145 = vmatpush1.xpose.msra.mxu0 %v97
    %146 = vmatprep.subr.mxu0 0.0
    %147 = vmatpush1.xpose.msra.mxu0 %v94
    %148 = vmatprep.subr.mxu0 0.0
    %149 = vmatpush1.xpose.msra.mxu0 %v91
    %150 = vmatprep.subr.mxu0 0.0
    %151 = vmatpush1.xpose.msra.mxu0 %v88
    %152 = vmatprep.subr.mxu0 0.0
    %153 = vmatpush1.xpose.msra.mxu0 %v85
    %154 = vmatprep.subr.mxu0 0.0
    %155 = vmatpush1.xpose.msra.mxu0 %v82
    %156 = vmatprep.subr.mxu0 0.0
    %157 = vmatpush1.xpose.msra.mxu0 %v79
    %158 = vmatprep.subr.mxu0 0.0
    %159 = vmatpush2.xpose.msra.mxu0 0.0
    %160 = vmatprep.subr.mxu0 0.0
    %161 = vmatpush2.xpose.msra.mxu0 0.0
    %162 = vmatprep.subr.mxu0 0.0
    %163 = vmatpush2.xpose.msra.mxu0 0.0
    %164 = vmatprep.subr.mxu0 0.0
    %165 = vmatpush2.xpose.msra.mxu0 0.0
    %166 = vmatprep.subr.mxu0 0.0
    %167 = vmatpush2.xpose.msra.mxu0 0.0
    %168 = vmatprep.subr.mxu0 0.0
    %169 = vmatpush2.xpose.msra.mxu0 0.0
    %170 = vmatprep.subr.mxu0 0.0
    %171 = vmatpush2.xpose.msra.mxu0 0.0
    %172 = vmatprep.subr.mxu0 0.0
    %173 = vmatpush2.xpose.msra.mxu0 0.0
    %174 = vmatprep.subr.mxu0 0.0
    %175 = vmatpush2.xpose.msra.mxu0 0.0
    %176 = vmatprep.subr.mxu0 0.0
    %177 = vmatpush2.xpose.msra.mxu0 0.0
    %178 = vmatprep.subr.mxu0 0.0
    %179 = vmatpush2.xpose.msra.mxu0 0.0
    %180 = vmatprep.subr.mxu0 0.0
    %181 = vmatpush2.xpose.msra.mxu0 0.0
    %182 = vmatprep.subr.mxu0 0.0
    %183 = vmatpush2.xpose.msra.mxu0 0.0
    %184 = vmatprep.subr.mxu0 0.0
    %185 = vmatpush2.xpose.msra.mxu0 0.0
    %186 = vmatprep.subr.mxu0 0.0
    %187 = vmatpush2.xpose.msra.mxu0 0.0
    %188 = vmatprep.subr.mxu0 0.0
    %189 = vmatpush2.xpose.msra.mxu0 0.0
    %190 = vmatprep.mubr.f32.mxu0 0.0
    %191 = vmatmul.mubr.f32.gmra.mxu0 %v67
    %v192 = vpop.f32.mrf.mxu0
    %v193 = vadd.f32 %v48, %v192
    %v194 = vpop.f32.mrf.mxu0
    %195 = vmatprep.mubr.f32.mxu0 0.0
    %196 = vmatmul.mubr.f32.gmra.mxu0 %v70
    %v197 = vpop.f32.mrf.mxu0
    %v198 = vadd.f32 %v53, %v197
    %v199 = vpop.f32.mrf.mxu0
    %200 = vmatprep.mubr.f32.mxu0 0.0
    %201 = vmatmul.mubr.f32.gmra.mxu0 %v73
    %v202 = vpop.f32.mrf.mxu0
    %v203 = vadd.f32 %v58, %v202
    %v204 = vpop.f32.mrf.mxu0
    %205 = vmatprep.mubr.f32.mxu0 0.0
    %206 = vmatmul.mubr.f32.gmra.mxu0 %v76
    %v207 = vpop.f32.mrf.mxu0
    %v208 = vadd.f32 %v63, %v207
    %v209 = vpop.f32.mrf.mxu0
    %210 = vdwg.mxu0
    %v211 = vmax.f32 %v193, 0.0
    %v212 = vmax.f32 %v198, 0.0
    %v213 = vmax.f32 %v203, 0.0
    %v214 = vmax.f32 %v208, 0.0
    %v215 = vld [vmem:[%s2] sm:$0xff]
    %v216 = vld [vmem:[%s2 + $0x8] sm:$0xff]
    %v217 = vld [vmem:[%s2 + $0x10] sm:$0xff]
    %v218 = vld [vmem:[%s2 + $0x18] sm:$0xff]
    %s219 = scalar_lea.vmem %s4, 32
    %v220 = vld [vmem:[%s219] sm:$0xff]
    %v221 = vld [vmem:[%s219 + $0x8] sm:$0xff]
    %v222 = vld [vmem:[%s219 + $0x10] sm:$0xff]
    %v223 = vld [vmem:[%s219 + $0x18] sm:$0xff]
    %225 = vset.pattern.permute.xlu0 0
    %226 = vperm.xlu0 %225, %v220
    %v227 = vpop.permute.xlu0 %226
    %230 = vset.pattern.permute.xlu0 0
    %231 = vperm.xlu0 %230, %v221
    %v232 = vpop.permute.xlu0 %231
    %235 = vset.pattern.permute.xlu0 0
    %236 = vperm.xlu0 %235, %v222
    %v237 = vpop.permute.xlu0 %236
    %240 = vset.pattern.permute.xlu0 0
    %241 = vperm.xlu0 %240, %v223
    %v242 = vpop.permute.xlu0 %241
    %vm244 = vcmask 261120
    %v246 = vsel %vm244, %v215, 0
    %v249 = vsel %vm244, %v216, 0
    %v252 = vsel %vm244, %v217, 0
    %v255 = vsel %vm244, %v218, 0
    %257 = vmatprep.subr.mxu0 0.0
    %258 = vmatpush1.msra.mxu0 0.0
    %259 = vmatprep.subr.mxu0 0.0
    %260 = vmatpush1.msra.mxu0 0.0
    %261 = vmatprep.subr.mxu0 0.0
    %262 = vmatpush1.msra.mxu0 0.0
    %263 = vmatprep.subr.mxu0 0.0
    %264 = vmatpush1.msra.mxu0 0.0
    %265 = vmatprep.subr.mxu0 0.0
    %266 = vmatpush1.msra.mxu0 0.0
    %267 = vmatprep.subr.mxu0 0.0
    %268 = vmatpush1.msra.mxu0 0.0
    %269 = vmatprep.subr.mxu0 0.0
    %270 = vmatpush1.msra.mxu0 0.0
    %271 = vmatprep.subr.mxu0 0.0
    %272 = vmatpush1.msra.mxu0 0.0
    %273 = vmatprep.subr.mxu0 0.0
    %274 = vmatpush1.msra.mxu0 0.0
    %275 = vmatprep.subr.mxu0 0.0
    %276 = vmatpush1.msra.mxu0 0.0
    %277 = vmatprep.subr.mxu0 0.0
    %278 = vmatpush1.msra.mxu0 0.0
    %279 = vmatprep.subr.mxu0 0.0
    %280 = vmatpush1.msra.mxu0 0.0
    %281 = vmatprep.subr.mxu0 0.0
    %282 = vmatpush1.msra.mxu0 %v214
    %283 = vmatprep.subr.mxu0 0.0
    %284 = vmatpush1.msra.mxu0 %v213
    %285 = vmatprep.subr.mxu0 0.0
    %286 = vmatpush1.msra.mxu0 %v212
    %287 = vmatprep.subr.mxu0 0.0
    %288 = vmatpush1.msra.mxu0 %v211
    %289 = vmatprep.subr.mxu0 0.0
    %290 = vmatpush2.msra.mxu0 0.0
    %291 = vmatprep.subr.mxu0 0.0
    %292 = vmatpush2.msra.mxu0 0.0
    %293 = vmatprep.subr.mxu0 0.0
    %294 = vmatpush2.msra.mxu0 0.0
    %295 = vmatprep.subr.mxu0 0.0
    %296 = vmatpush2.msra.mxu0 0.0
    %297 = vmatprep.subr.mxu0 0.0
    %298 = vmatpush2.msra.mxu0 0.0
    %299 = vmatprep.subr.mxu0 0.0
    %300 = vmatpush2.msra.mxu0 0.0
    %301 = vmatprep.subr.mxu0 0.0
    %302 = vmatpush2.msra.mxu0 0.0
    %303 = vmatprep.subr.mxu0 0.0
    %304 = vmatpush2.msra.mxu0 0.0
    %305 = vmatprep.subr.mxu0 0.0
    %306 = vmatpush2.msra.mxu0 0.0
    %307 = vmatprep.subr.mxu0 0.0
    %308 = vmatpush2.msra.mxu0 0.0
    %309 = vmatprep.subr.mxu0 0.0
    %310 = vmatpush2.msra.mxu0 0.0
    %311 = vmatprep.subr.mxu0 0.0
    %312 = vmatpush2.msra.mxu0 0.0
    %313 = vmatprep.subr.mxu0 0.0
    %314 = vmatpush2.msra.mxu0 0.0
    %315 = vmatprep.subr.mxu0 0.0
    %316 = vmatpush2.msra.mxu0 0.0
    %317 = vmatprep.subr.mxu0 0.0
    %318 = vmatpush2.msra.mxu0 0.0
    %319 = vmatprep.subr.mxu0 0.0
    %320 = vmatpush2.msra.mxu0 0.0
    %321 = vmatprep.mubr.f32.mxu0 0.0
    %322 = vmatmul.mubr.f32.gmra.mxu0 %v246
    %v323 = vpop.f32.mrf.mxu0
    %v324 = vadd.f32 %v227, %v323
    %v325 = vpop.f32.mrf.mxu0
    %326 = vmatprep.mubr.f32.mxu0 0.0
    %327 = vmatmul.mubr.f32.gmra.mxu0 %v249
    %v328 = vpop.f32.mrf.mxu0
    %v329 = vadd.f32 %v232, %v328
    %v330 = vpop.f32.mrf.mxu0
    %331 = vmatprep.mubr.f32.mxu0 0.0
    %332 = vmatmul.mubr.f32.gmra.mxu0 %v252
    %v333 = vpop.f32.mrf.mxu0
    %v334 = vadd.f32 %v237, %v333
    %v335 = vpop.f32.mrf.mxu0
    %336 = vmatprep.mubr.f32.mxu0 0.0
    %337 = vmatmul.mubr.f32.gmra.mxu0 %v255
    %v338 = vpop.f32.mrf.mxu0
    %v339 = vadd.f32 %v242, %v338
    %v340 = vpop.f32.mrf.mxu0
    %341 = vdwg.mxu0
    %v342 = vmax.f32 %v324, 0.0
    %v343 = vmax.f32 %v329, 0.0
    %v344 = vmax.f32 %v334, 0.0
    %v345 = vmax.f32 %v339, 0.0
    %s346 = scalar_lea.vmem %s2, 32
    %v347 = vld [vmem:[%s346] sm:$0xff]
    %v348 = vld [vmem:[%s346 + $0x8] sm:$0xff]
    %v349 = vld [vmem:[%s346 + $0x10] sm:$0xff]
    %v350 = vld [vmem:[%s346 + $0x18] sm:$0xff]
    %s351 = scalar_lea.vmem %s4, 64
    %v352 = vld [vmem:[%s351] sm:$0xff]
    %v353 = vld [vmem:[%s351 + $0x8] sm:$0xff]
    %v354 = vld [vmem:[%s351 + $0x10] sm:$0xff]
    %v355 = vld [vmem:[%s351 + $0x18] sm:$0xff]
    %357 = vset.pattern.permute.xlu0 0
    %358 = vperm.xlu0 %357, %v352
    %v359 = vpop.permute.xlu0 %358
    %362 = vset.pattern.permute.xlu0 0
    %363 = vperm.xlu0 %362, %v353
    %v364 = vpop.permute.xlu0 %363
    %367 = vset.pattern.permute.xlu0 0
    %368 = vperm.xlu0 %367, %v354
    %v369 = vpop.permute.xlu0 %368
    %372 = vset.pattern.permute.xlu0 0
    %373 = vperm.xlu0 %372, %v355
    %v374 = vpop.permute.xlu0 %373
    %v377 = vsel %vm244, %v347, 0
    %v380 = vsel %vm244, %v348, 0
    %v383 = vsel %vm244, %v349, 0
    %v386 = vsel %vm244, %v350, 0
    %388 = vmatprep.subr.mxu0 0.0
    %389 = vmatpush1.msra.mxu0 0.0
    %390 = vmatprep.subr.mxu0 0.0
    %391 = vmatpush1.msra.mxu0 0.0
    %392 = vmatprep.subr.mxu0 0.0
    %393 = vmatpush1.msra.mxu0 0.0
    %394 = vmatprep.subr.mxu0 0.0
    %395 = vmatpush1.msra.mxu0 0.0
    %396 = vmatprep.subr.mxu0 0.0
    %397 = vmatpush1.msra.mxu0 0.0
    %398 = vmatprep.subr.mxu0 0.0
    %399 = vmatpush1.msra.mxu0 0.0
    %400 = vmatprep.subr.mxu0 0.0
    %401 = vmatpush1.msra.mxu0 0.0
    %402 = vmatprep.subr.mxu0 0.0
    %403 = vmatpush1.msra.mxu0 0.0
    %404 = vmatprep.subr.mxu0 0.0
    %405 = vmatpush1.msra.mxu0 0.0
    %406 = vmatprep.subr.mxu0 0.0
    %407 = vmatpush1.msra.mxu0 0.0
    %408 = vmatprep.subr.mxu0 0.0
    %409 = vmatpush1.msra.mxu0 0.0
    %410 = vmatprep.subr.mxu0 0.0
    %411 = vmatpush1.msra.mxu0 0.0
    %412 = vmatprep.subr.mxu0 0.0
    %413 = vmatpush1.msra.mxu0 %v345
    %414 = vmatprep.subr.mxu0 0.0
    %415 = vmatpush1.msra.mxu0 %v344
    %416 = vmatprep.subr.mxu0 0.0
    %417 = vmatpush1.msra.mxu0 %v343
    %418 = vmatprep.subr.mxu0 0.0
    %419 = vmatpush1.msra.mxu0 %v342
    %420 = vmatprep.subr.mxu0 0.0
    %421 = vmatpush2.msra.mxu0 0.0
    %422 = vmatprep.subr.mxu0 0.0
    %423 = vmatpush2.msra.mxu0 0.0
    %424 = vmatprep.subr.mxu0 0.0
    %425 = vmatpush2.msra.mxu0 0.0
    %426 = vmatprep.subr.mxu0 0.0
    %427 = vmatpush2.msra.mxu0 0.0
    %428 = vmatprep.subr.mxu0 0.0
    %429 = vmatpush2.msra.mxu0 0.0
    %430 = vmatprep.subr.mxu0 0.0
    %431 = vmatpush2.msra.mxu0 0.0
    %432 = vmatprep.subr.mxu0 0.0
    %433 = vmatpush2.msra.mxu0 0.0
    %434 = vmatprep.subr.mxu0 0.0
    %435 = vmatpush2.msra.mxu0 0.0
    %436 = vmatprep.subr.mxu0 0.0
    %437 = vmatpush2.msra.mxu0 0.0
    %438 = vmatprep.subr.mxu0 0.0
    %439 = vmatpush2.msra.mxu0 0.0
    %440 = vmatprep.subr.mxu0 0.0
    %441 = vmatpush2.msra.mxu0 0.0
    %442 = vmatprep.subr.mxu0 0.0
    %443 = vmatpush2.msra.mxu0 0.0
    %444 = vmatprep.subr.mxu0 0.0
    %445 = vmatpush2.msra.mxu0 0.0
    %446 = vmatprep.subr.mxu0 0.0
    %447 = vmatpush2.msra.mxu0 0.0
    %448 = vmatprep.subr.mxu0 0.0
    %449 = vmatpush2.msra.mxu0 0.0
    %450 = vmatprep.subr.mxu0 0.0
    %451 = vmatpush2.msra.mxu0 0.0
    %452 = vmatprep.mubr.f32.mxu0 0.0
    %453 = vmatmul.mubr.f32.gmra.mxu0 %v377
    %v454 = vpop.f32.mrf.mxu0
    %v455 = vadd.f32 %v359, %v454
    %v456 = vpop.f32.mrf.mxu0
    %457 = vmatprep.mubr.f32.mxu0 0.0
    %458 = vmatmul.mubr.f32.gmra.mxu0 %v380
    %v459 = vpop.f32.mrf.mxu0
    %v460 = vadd.f32 %v364, %v459
    %v461 = vpop.f32.mrf.mxu0
    %462 = vmatprep.mubr.f32.mxu0 0.0
    %463 = vmatmul.mubr.f32.gmra.mxu0 %v383
    %v464 = vpop.f32.mrf.mxu0
    %v465 = vadd.f32 %v369, %v464
    %v466 = vpop.f32.mrf.mxu0
    %467 = vmatprep.mubr.f32.mxu0 0.0
    %468 = vmatmul.mubr.f32.gmra.mxu0 %v386
    %v469 = vpop.f32.mrf.mxu0
    %v470 = vadd.f32 %v374, %v469
    %v471 = vpop.f32.mrf.mxu0
    %472 = vdwg.mxu0
    %v473 = vmax.f32 %v455, 0.0
    %v474 = vmax.f32 %v460, 0.0
    %v475 = vmax.f32 %v465, 0.0
    %v476 = vmax.f32 %v470, 0.0
    %s477 = scalar_lea.vmem %s2, 64
    %v478 = vld [vmem:[%s477] sm:$0xff]
    %v479 = vld [vmem:[%s477 + $0x8] sm:$0xff]
    %v480 = vld [vmem:[%s477 + $0x10] sm:$0xff]
    %v481 = vld [vmem:[%s477 + $0x18] sm:$0xff]
    %s482 = scalar_lea.vmem %s4, 96
    %v483 = vld [vmem:[%s482] sm:$0xff]
    %v484 = vld [vmem:[%s482 + $0x8] sm:$0xff]
    %v485 = vld [vmem:[%s482 + $0x10] sm:$0xff]
    %v486 = vld [vmem:[%s482 + $0x18] sm:$0xff]
    %488 = vset.pattern.permute.xlu0 0
    %489 = vperm.xlu0 %488, %v483
    %v490 = vpop.permute.xlu0 %489
    %493 = vset.pattern.permute.xlu0 0
    %494 = vperm.xlu0 %493, %v484
    %v495 = vpop.permute.xlu0 %494
    %498 = vset.pattern.permute.xlu0 0
    %499 = vperm.xlu0 %498, %v485
    %v500 = vpop.permute.xlu0 %499
    %503 = vset.pattern.permute.xlu0 0
    %504 = vperm.xlu0 %503, %v486
    %v505 = vpop.permute.xlu0 %504
    %v508 = vsel %vm244, %v478, 0
    %v511 = vsel %vm244, %v479, 0
    %v514 = vsel %vm244, %v480, 0
    %v517 = vsel %vm244, %v481, 0
    %519 = vmatprep.subr.mxu0 0.0
    %520 = vmatpush1.msra.mxu0 0.0
    %521 = vmatprep.subr.mxu0 0.0
    %522 = vmatpush1.msra.mxu0 0.0
    %523 = vmatprep.subr.mxu0 0.0
    %524 = vmatpush1.msra.mxu0 0.0
    %525 = vmatprep.subr.mxu0 0.0
    %526 = vmatpush1.msra.mxu0 0.0
    %527 = vmatprep.subr.mxu0 0.0
    %528 = vmatpush1.msra.mxu0 0.0
    %529 = vmatprep.subr.mxu0 0.0
    %530 = vmatpush1.msra.mxu0 0.0
    %531 = vmatprep.subr.mxu0 0.0
    %532 = vmatpush1.msra.mxu0 0.0
    %533 = vmatprep.subr.mxu0 0.0
    %534 = vmatpush1.msra.mxu0 0.0
    %535 = vmatprep.subr.mxu0 0.0
    %536 = vmatpush1.msra.mxu0 0.0
    %537 = vmatprep.subr.mxu0 0.0
    %538 = vmatpush1.msra.mxu0 0.0
    %539 = vmatprep.subr.mxu0 0.0
    %540 = vmatpush1.msra.mxu0 0.0
    %541 = vmatprep.subr.mxu0 0.0
    %542 = vmatpush1.msra.mxu0 0.0
    %543 = vmatprep.subr.mxu0 0.0
    %544 = vmatpush1.msra.mxu0 %v476
    %545 = vmatprep.subr.mxu0 0.0
    %546 = vmatpush1.msra.mxu0 %v475
    %547 = vmatprep.subr.mxu0 0.0
    %548 = vmatpush1.msra.mxu0 %v474
    %549 = vmatprep.subr.mxu0 0.0
    %550 = vmatpush1.msra.mxu0 %v473
    %551 = vmatprep.subr.mxu0 0.0
    %552 = vmatpush2.msra.mxu0 0.0
    %553 = vmatprep.subr.mxu0 0.0
    %554 = vmatpush2.msra.mxu0 0.0
    %555 = vmatprep.subr.mxu0 0.0
    %556 = vmatpush2.msra.mxu0 0.0
    %557 = vmatprep.subr.mxu0 0.0
    %558 = vmatpush2.msra.mxu0 0.0
    %559 = vmatprep.subr.mxu0 0.0
    %560 = vmatpush2.msra.mxu0 0.0
    %561 = vmatprep.subr.mxu0 0.0
    %562 = vmatpush2.msra.mxu0 0.0
    %563 = vmatprep.subr.mxu0 0.0
    %564 = vmatpush2.msra.mxu0 0.0
    %565 = vmatprep.subr.mxu0 0.0
    %566 = vmatpush2.msra.mxu0 0.0
    %567 = vmatprep.subr.mxu0 0.0
    %568 = vmatpush2.msra.mxu0 0.0
    %569 = vmatprep.subr.mxu0 0.0
    %570 = vmatpush2.msra.mxu0 0.0
    %571 = vmatprep.subr.mxu0 0.0
    %572 = vmatpush2.msra.mxu0 0.0
    %573 = vmatprep.subr.mxu0 0.0
    %574 = vmatpush2.msra.mxu0 0.0
    %575 = vmatprep.subr.mxu0 0.0
    %576 = vmatpush2.msra.mxu0 0.0
    %577 = vmatprep.subr.mxu0 0.0
    %578 = vmatpush2.msra.mxu0 0.0
    %579 = vmatprep.subr.mxu0 0.0
    %580 = vmatpush2.msra.mxu0 0.0
    %581 = vmatprep.subr.mxu0 0.0
    %582 = vmatpush2.msra.mxu0 0.0
    %583 = vmatprep.mubr.f32.mxu0 0.0
    %584 = vmatmul.mubr.f32.gmra.mxu0 %v508
    %v585 = vpop.f32.mrf.mxu0
    %v586 = vadd.f32 %v490, %v585
    %v587 = vpop.f32.mrf.mxu0
    %588 = vmatprep.mubr.f32.mxu0 0.0
    %589 = vmatmul.mubr.f32.gmra.mxu0 %v511
    %v590 = vpop.f32.mrf.mxu0
    %v591 = vadd.f32 %v495, %v590
    %v592 = vpop.f32.mrf.mxu0
    %593 = vmatprep.mubr.f32.mxu0 0.0
    %594 = vmatmul.mubr.f32.gmra.mxu0 %v514
    %v595 = vpop.f32.mrf.mxu0
    %v596 = vadd.f32 %v500, %v595
    %v597 = vpop.f32.mrf.mxu0
    %598 = vmatprep.mubr.f32.mxu0 0.0
    %599 = vmatmul.mubr.f32.gmra.mxu0 %v517
    %v600 = vpop.f32.mrf.mxu0
    %v601 = vadd.f32 %v505, %v600
    %v602 = vpop.f32.mrf.mxu0
    %603 = vdwg.mxu0
    %v604 = vmax.f32 %v586, 0.0
    %v605 = vmax.f32 %v591, 0.0
    %v606 = vmax.f32 %v596, 0.0
    %v607 = vmax.f32 %v601, 0.0
    %s608 = scalar_lea.vmem %s2, 96
    %v609 = vld [vmem:[%s608] sm:$0xff]
    %v610 = vld [vmem:[%s608 + $0x8] sm:$0xff]
    %v611 = vld [vmem:[%s608 + $0x10] sm:$0xff]
    %v612 = vld [vmem:[%s608 + $0x18] sm:$0xff]
    %s613 = scalar_lea.vmem %s4, 128
    %v614 = vld [vmem:[%s613] sm:$0xff]
    %v615 = vld [vmem:[%s613 + $0x8] sm:$0xff]
    %v616 = vld [vmem:[%s613 + $0x10] sm:$0xff]
    %v617 = vld [vmem:[%s613 + $0x18] sm:$0xff]
    %619 = vset.pattern.permute.xlu0 0
    %620 = vperm.xlu0 %619, %v614
    %v621 = vpop.permute.xlu0 %620
    %624 = vset.pattern.permute.xlu0 0
    %625 = vperm.xlu0 %624, %v615
    %v626 = vpop.permute.xlu0 %625
    %629 = vset.pattern.permute.xlu0 0
    %630 = vperm.xlu0 %629, %v616
    %v631 = vpop.permute.xlu0 %630
    %634 = vset.pattern.permute.xlu0 0
    %635 = vperm.xlu0 %634, %v617
    %v636 = vpop.permute.xlu0 %635
    %v639 = vsel %vm244, %v609, 0
    %v642 = vsel %vm244, %v610, 0
    %v645 = vsel %vm244, %v611, 0
    %v648 = vsel %vm244, %v612, 0
    %650 = vmatprep.subr.mxu0 0.0
    %651 = vmatpush1.msra.mxu0 0.0
    %652 = vmatprep.subr.mxu0 0.0
    %653 = vmatpush1.msra.mxu0 0.0
    %654 = vmatprep.subr.mxu0 0.0
    %655 = vmatpush1.msra.mxu0 0.0
    %656 = vmatprep.subr.mxu0 0.0
    %657 = vmatpush1.msra.mxu0 0.0
    %658 = vmatprep.subr.mxu0 0.0
    %659 = vmatpush1.msra.mxu0 0.0
    %660 = vmatprep.subr.mxu0 0.0
    %661 = vmatpush1.msra.mxu0 0.0
    %662 = vmatprep.subr.mxu0 0.0
    %663 = vmatpush1.msra.mxu0 0.0
    %664 = vmatprep.subr.mxu0 0.0
    %665 = vmatpush1.msra.mxu0 0.0
    %666 = vmatprep.subr.mxu0 0.0
    %667 = vmatpush1.msra.mxu0 0.0
    %668 = vmatprep.subr.mxu0 0.0
    %669 = vmatpush1.msra.mxu0 0.0
    %670 = vmatprep.subr.mxu0 0.0
    %671 = vmatpush1.msra.mxu0 0.0
    %672 = vmatprep.subr.mxu0 0.0
    %673 = vmatpush1.msra.mxu0 0.0
    %674 = vmatprep.subr.mxu0 0.0
    %675 = vmatpush1.msra.mxu0 %v607
    %676 = vmatprep.subr.mxu0 0.0
    %677 = vmatpush1.msra.mxu0 %v606
    %678 = vmatprep.subr.mxu0 0.0
    %679 = vmatpush1.msra.mxu0 %v605
    %680 = vmatprep.subr.mxu0 0.0
    %681 = vmatpush1.msra.mxu0 %v604
    %682 = vmatprep.subr.mxu0 0.0
    %683 = vmatpush2.msra.mxu0 0.0
    %684 = vmatprep.subr.mxu0 0.0
    %685 = vmatpush2.msra.mxu0 0.0
    %686 = vmatprep.subr.mxu0 0.0
    %687 = vmatpush2.msra.mxu0 0.0
    %688 = vmatprep.subr.mxu0 0.0
    %689 = vmatpush2.msra.mxu0 0.0
    %690 = vmatprep.subr.mxu0 0.0
    %691 = vmatpush2.msra.mxu0 0.0
    %692 = vmatprep.subr.mxu0 0.0
    %693 = vmatpush2.msra.mxu0 0.0
    %694 = vmatprep.subr.mxu0 0.0
    %695 = vmatpush2.msra.mxu0 0.0
    %696 = vmatprep.subr.mxu0 0.0
    %697 = vmatpush2.msra.mxu0 0.0
    %698 = vmatprep.subr.mxu0 0.0
    %699 = vmatpush2.msra.mxu0 0.0
    %700 = vmatprep.subr.mxu0 0.0
    %701 = vmatpush2.msra.mxu0 0.0
    %702 = vmatprep.subr.mxu0 0.0
    %703 = vmatpush2.msra.mxu0 0.0
    %704 = vmatprep.subr.mxu0 0.0
    %705 = vmatpush2.msra.mxu0 0.0
    %706 = vmatprep.subr.mxu0 0.0
    %707 = vmatpush2.msra.mxu0 0.0
    %708 = vmatprep.subr.mxu0 0.0
    %709 = vmatpush2.msra.mxu0 0.0
    %710 = vmatprep.subr.mxu0 0.0
    %711 = vmatpush2.msra.mxu0 0.0
    %712 = vmatprep.subr.mxu0 0.0
    %713 = vmatpush2.msra.mxu0 0.0
    %714 = vmatprep.mubr.f32.mxu0 0.0
    %715 = vmatmul.mubr.f32.gmra.mxu0 %v639
    %v716 = vpop.f32.mrf.mxu0
    %v717 = vadd.f32 %v621, %v716
    %v718 = vpop.f32.mrf.mxu0
    %719 = vmatprep.mubr.f32.mxu0 0.0
    %720 = vmatmul.mubr.f32.gmra.mxu0 %v642
    %v721 = vpop.f32.mrf.mxu0
    %v722 = vadd.f32 %v626, %v721
    %v723 = vpop.f32.mrf.mxu0
    %724 = vmatprep.mubr.f32.mxu0 0.0
    %725 = vmatmul.mubr.f32.gmra.mxu0 %v645
    %v726 = vpop.f32.mrf.mxu0
    %v727 = vadd.f32 %v631, %v726
    %v728 = vpop.f32.mrf.mxu0
    %729 = vmatprep.mubr.f32.mxu0 0.0
    %730 = vmatmul.mubr.f32.gmra.mxu0 %v648
    %v731 = vpop.f32.mrf.mxu0
    %v732 = vadd.f32 %v636, %v731
    %v733 = vpop.f32.mrf.mxu0
    %734 = vdwg.mxu0
    %v735 = vmax.f32 %v717, 0.0
    %v736 = vmax.f32 %v722, 0.0
    %v737 = vmax.f32 %v727, 0.0
    %v738 = vmax.f32 %v732, 0.0
    %s739 = scalar_lea.vmem %s2, 128
    %v740 = vld [vmem:[%s739] sm:$0xff]
    %v741 = vld [vmem:[%s739 + $0x8] sm:$0xff]
    %v742 = vld [vmem:[%s739 + $0x10] sm:$0xff]
    %v743 = vld [vmem:[%s739 + $0x18] sm:$0xff]
    %s744 = scalar_lea.vmem %s4, 160
    %v745 = vld [vmem:[%s744] sm:$0xff]
    %v746 = vld [vmem:[%s744 + $0x8] sm:$0xff]
    %v747 = vld [vmem:[%s744 + $0x10] sm:$0xff]
    %v748 = vld [vmem:[%s744 + $0x18] sm:$0xff]
    %750 = vset.pattern.permute.xlu0 0
    %751 = vperm.xlu0 %750, %v745
    %v752 = vpop.permute.xlu0 %751
    %755 = vset.pattern.permute.xlu0 0
    %756 = vperm.xlu0 %755, %v746
    %v757 = vpop.permute.xlu0 %756
    %760 = vset.pattern.permute.xlu0 0
    %761 = vperm.xlu0 %760, %v747
    %v762 = vpop.permute.xlu0 %761
    %765 = vset.pattern.permute.xlu0 0
    %766 = vperm.xlu0 %765, %v748
    %v767 = vpop.permute.xlu0 %766
    %v770 = vsel %vm244, %v740, 0
    %v773 = vsel %vm244, %v741, 0
    %v776 = vsel %vm244, %v742, 0
    %v779 = vsel %vm244, %v743, 0
    %781 = vmatprep.subr.mxu0 0.0
    %782 = vmatpush1.msra.mxu0 0.0
    %783 = vmatprep.subr.mxu0 0.0
    %784 = vmatpush1.msra.mxu0 0.0
    %785 = vmatprep.subr.mxu0 0.0
    %786 = vmatpush1.msra.mxu0 0.0
    %787 = vmatprep.subr.mxu0 0.0
    %788 = vmatpush1.msra.mxu0 0.0
    %789 = vmatprep.subr.mxu0 0.0
    %790 = vmatpush1.msra.mxu0 0.0
    %791 = vmatprep.subr.mxu0 0.0
    %792 = vmatpush1.msra.mxu0 0.0
    %793 = vmatprep.subr.mxu0 0.0
    %794 = vmatpush1.msra.mxu0 0.0
    %795 = vmatprep.subr.mxu0 0.0
    %796 = vmatpush1.msra.mxu0 0.0
    %797 = vmatprep.subr.mxu0 0.0
    %798 = vmatpush1.msra.mxu0 0.0
    %799 = vmatprep.subr.mxu0 0.0
    %800 = vmatpush1.msra.mxu0 0.0
    %801 = vmatprep.subr.mxu0 0.0
    %802 = vmatpush1.msra.mxu0 0.0
    %803 = vmatprep.subr.mxu0 0.0
    %804 = vmatpush1.msra.mxu0 0.0
    %805 = vmatprep.subr.mxu0 0.0
    %806 = vmatpush1.msra.mxu0 %v738
    %807 = vmatprep.subr.mxu0 0.0
    %808 = vmatpush1.msra.mxu0 %v737
    %809 = vmatprep.subr.mxu0 0.0
    %810 = vmatpush1.msra.mxu0 %v736
    %811 = vmatprep.subr.mxu0 0.0
    %812 = vmatpush1.msra.mxu0 %v735
    %813 = vmatprep.subr.mxu0 0.0
    %814 = vmatpush2.msra.mxu0 0.0
    %815 = vmatprep.subr.mxu0 0.0
    %816 = vmatpush2.msra.mxu0 0.0
    %817 = vmatprep.subr.mxu0 0.0
    %818 = vmatpush2.msra.mxu0 0.0
    %819 = vmatprep.subr.mxu0 0.0
    %820 = vmatpush2.msra.mxu0 0.0
    %821 = vmatprep.subr.mxu0 0.0
    %822 = vmatpush2.msra.mxu0 0.0
    %823 = vmatprep.subr.mxu0 0.0
    %824 = vmatpush2.msra.mxu0 0.0
    %825 = vmatprep.subr.mxu0 0.0
    %826 = vmatpush2.msra.mxu0 0.0
    %827 = vmatprep.subr.mxu0 0.0
    %828 = vmatpush2.msra.mxu0 0.0
    %829 = vmatprep.subr.mxu0 0.0
    %830 = vmatpush2.msra.mxu0 0.0
    %831 = vmatprep.subr.mxu0 0.0
    %832 = vmatpush2.msra.mxu0 0.0
    %833 = vmatprep.subr.mxu0 0.0
    %834 = vmatpush2.msra.mxu0 0.0
    %835 = vmatprep.subr.mxu0 0.0
    %836 = vmatpush2.msra.mxu0 0.0
    %837 = vmatprep.subr.mxu0 0.0
    %838 = vmatpush2.msra.mxu0 0.0
    %839 = vmatprep.subr.mxu0 0.0
    %840 = vmatpush2.msra.mxu0 0.0
    %841 = vmatprep.subr.mxu0 0.0
    %842 = vmatpush2.msra.mxu0 0.0
    %843 = vmatprep.subr.mxu0 0.0
    %844 = vmatpush2.msra.mxu0 0.0
    %845 = vmatprep.mubr.f32.mxu0 0.0
    %846 = vmatmul.mubr.f32.gmra.mxu0 %v770
    %v847 = vpop.f32.mrf.mxu0
    %v848 = vadd.f32 %v752, %v847
    %v849 = vpop.f32.mrf.mxu0
    %850 = vmatprep.mubr.f32.mxu0 0.0
    %851 = vmatmul.mubr.f32.gmra.mxu0 %v773
    %v852 = vpop.f32.mrf.mxu0
    %v853 = vadd.f32 %v757, %v852
    %v854 = vpop.f32.mrf.mxu0
    %855 = vmatprep.mubr.f32.mxu0 0.0
    %856 = vmatmul.mubr.f32.gmra.mxu0 %v776
    %v857 = vpop.f32.mrf.mxu0
    %v858 = vadd.f32 %v762, %v857
    %v859 = vpop.f32.mrf.mxu0
    %860 = vmatprep.mubr.f32.mxu0 0.0
    %861 = vmatmul.mubr.f32.gmra.mxu0 %v779
    %v862 = vpop.f32.mrf.mxu0
    %v863 = vadd.f32 %v767, %v862
    %v864 = vpop.f32.mrf.mxu0
    %865 = vdwg.mxu0
    %v866 = vmax.f32 %v848, 0.0
    %v867 = vmax.f32 %v853, 0.0
    %v868 = vmax.f32 %v858, 0.0
    %v869 = vmax.f32 %v863, 0.0
    %s870 = scalar_lea.vmem %s2, 160
    %v871 = vld [vmem:[%s870] sm:$0xff]
    %v872 = vld [vmem:[%s870 + $0x8] sm:$0xff]
    %v873 = vld [vmem:[%s870 + $0x10] sm:$0xff]
    %v874 = vld [vmem:[%s870 + $0x18] sm:$0xff]
    %s875 = scalar_lea.vmem %s4, 192
    %v876 = vld [vmem:[%s875] sm:$0xff]
    %v877 = vld [vmem:[%s875 + $0x8] sm:$0xff]
    %v878 = vld [vmem:[%s875 + $0x10] sm:$0xff]
    %v879 = vld [vmem:[%s875 + $0x18] sm:$0xff]
    %881 = vset.pattern.permute.xlu0 0
    %882 = vperm.xlu0 %881, %v876
    %v883 = vpop.permute.xlu0 %882
    %886 = vset.pattern.permute.xlu0 0
    %887 = vperm.xlu0 %886, %v877
    %v888 = vpop.permute.xlu0 %887
    %891 = vset.pattern.permute.xlu0 0
    %892 = vperm.xlu0 %891, %v878
    %v893 = vpop.permute.xlu0 %892
    %896 = vset.pattern.permute.xlu0 0
    %897 = vperm.xlu0 %896, %v879
    %v898 = vpop.permute.xlu0 %897
    %v901 = vsel %vm244, %v871, 0
    %v904 = vsel %vm244, %v872, 0
    %v907 = vsel %vm244, %v873, 0
    %v910 = vsel %vm244, %v874, 0
    %912 = vmatprep.subr.mxu0 0.0
    %913 = vmatpush1.msra.mxu0 0.0
    %914 = vmatprep.subr.mxu0 0.0
    %915 = vmatpush1.msra.mxu0 0.0
    %916 = vmatprep.subr.mxu0 0.0
    %917 = vmatpush1.msra.mxu0 0.0
    %918 = vmatprep.subr.mxu0 0.0
    %919 = vmatpush1.msra.mxu0 0.0
    %920 = vmatprep.subr.mxu0 0.0
    %921 = vmatpush1.msra.mxu0 0.0
    %922 = vmatprep.subr.mxu0 0.0
    %923 = vmatpush1.msra.mxu0 0.0
    %924 = vmatprep.subr.mxu0 0.0
    %925 = vmatpush1.msra.mxu0 0.0
    %926 = vmatprep.subr.mxu0 0.0
    %927 = vmatpush1.msra.mxu0 0.0
    %928 = vmatprep.subr.mxu0 0.0
    %929 = vmatpush1.msra.mxu0 0.0
    %930 = vmatprep.subr.mxu0 0.0
    %931 = vmatpush1.msra.mxu0 0.0
    %932 = vmatprep.subr.mxu0 0.0
    %933 = vmatpush1.msra.mxu0 0.0
    %934 = vmatprep.subr.mxu0 0.0
    %935 = vmatpush1.msra.mxu0 0.0
    %936 = vmatprep.subr.mxu0 0.0
    %937 = vmatpush1.msra.mxu0 %v869
    %938 = vmatprep.subr.mxu0 0.0
    %939 = vmatpush1.msra.mxu0 %v868
    %940 = vmatprep.subr.mxu0 0.0
    %941 = vmatpush1.msra.mxu0 %v867
    %942 = vmatprep.subr.mxu0 0.0
    %943 = vmatpush1.msra.mxu0 %v866
    %944 = vmatprep.subr.mxu0 0.0
    %945 = vmatpush2.msra.mxu0 0.0
    %946 = vmatprep.subr.mxu0 0.0
    %947 = vmatpush2.msra.mxu0 0.0
    %948 = vmatprep.subr.mxu0 0.0
    %949 = vmatpush2.msra.mxu0 0.0
    %950 = vmatprep.subr.mxu0 0.0
    %951 = vmatpush2.msra.mxu0 0.0
    %952 = vmatprep.subr.mxu0 0.0
    %953 = vmatpush2.msra.mxu0 0.0
    %954 = vmatprep.subr.mxu0 0.0
    %955 = vmatpush2.msra.mxu0 0.0
    %956 = vmatprep.subr.mxu0 0.0
    %957 = vmatpush2.msra.mxu0 0.0
    %958 = vmatprep.subr.mxu0 0.0
    %959 = vmatpush2.msra.mxu0 0.0
    %960 = vmatprep.subr.mxu0 0.0
    %961 = vmatpush2.msra.mxu0 0.0
    %962 = vmatprep.subr.mxu0 0.0
    %963 = vmatpush2.msra.mxu0 0.0
    %964 = vmatprep.subr.mxu0 0.0
    %965 = vmatpush2.msra.mxu0 0.0
    %966 = vmatprep.subr.mxu0 0.0
    %967 = vmatpush2.msra.mxu0 0.0
    %968 = vmatprep.subr.mxu0 0.0
    %969 = vmatpush2.msra.mxu0 0.0
    %970 = vmatprep.subr.mxu0 0.0
    %971 = vmatpush2.msra.mxu0 0.0
    %972 = vmatprep.subr.mxu0 0.0
    %973 = vmatpush2.msra.mxu0 0.0
    %974 = vmatprep.subr.mxu0 0.0
    %975 = vmatpush2.msra.mxu0 0.0
    %976 = vmatprep.mubr.f32.mxu0 0.0
    %977 = vmatmul.mubr.f32.gmra.mxu0 %v901
    %v978 = vpop.f32.mrf.mxu0
    %v979 = vadd.f32 %v883, %v978
    %v980 = vpop.f32.mrf.mxu0
    %981 = vmatprep.mubr.f32.mxu0 0.0
    %982 = vmatmul.mubr.f32.gmra.mxu0 %v904
    %v983 = vpop.f32.mrf.mxu0
    %v984 = vadd.f32 %v888, %v983
    %v985 = vpop.f32.mrf.mxu0
    %986 = vmatprep.mubr.f32.mxu0 0.0
    %987 = vmatmul.mubr.f32.gmra.mxu0 %v907
    %v988 = vpop.f32.mrf.mxu0
    %v989 = vadd.f32 %v893, %v988
    %v990 = vpop.f32.mrf.mxu0
    %991 = vmatprep.mubr.f32.mxu0 0.0
    %992 = vmatmul.mubr.f32.gmra.mxu0 %v910
    %v993 = vpop.f32.mrf.mxu0
    %v994 = vadd.f32 %v898, %v993
    %v995 = vpop.f32.mrf.mxu0
    %996 = vdwg.mxu0
    %v997 = vmax.f32 %v979, 0.0
    %v998 = vmax.f32 %v984, 0.0
    %v999 = vmax.f32 %v989, 0.0
    %v1000 = vmax.f32 %v994, 0.0
    %s1001 = scalar_lea.vmem %s2, 192
    %v1002 = vld [vmem:[%s1001] sm:$0xff]
    %v1003 = vld [vmem:[%s1001 + $0x8] sm:$0xff]
    %v1004 = vld [vmem:[%s1001 + $0x10] sm:$0xff]
    %v1005 = vld [vmem:[%s1001 + $0x18] sm:$0xff]
    %s1006 = scalar_lea.vmem %s4, 224
    %v1007 = vld [vmem:[%s1006] sm:$0xff]
    %v1008 = vld [vmem:[%s1006 + $0x8] sm:$0xff]
    %v1009 = vld [vmem:[%s1006 + $0x10] sm:$0xff]
    %v1010 = vld [vmem:[%s1006 + $0x18] sm:$0xff]
    %1012 = vset.pattern.permute.xlu0 0
    %1013 = vperm.xlu0 %1012, %v1007
    %v1014 = vpop.permute.xlu0 %1013
    %1017 = vset.pattern.permute.xlu0 0
    %1018 = vperm.xlu0 %1017, %v1008
    %v1019 = vpop.permute.xlu0 %1018
    %1022 = vset.pattern.permute.xlu0 0
    %1023 = vperm.xlu0 %1022, %v1009
    %v1024 = vpop.permute.xlu0 %1023
    %1027 = vset.pattern.permute.xlu0 0
    %1028 = vperm.xlu0 %1027, %v1010
    %v1029 = vpop.permute.xlu0 %1028
    %v1032 = vsel %vm244, %v1002, 0
    %v1035 = vsel %vm244, %v1003, 0
    %v1038 = vsel %vm244, %v1004, 0
    %v1041 = vsel %vm244, %v1005, 0
    %1043 = vmatprep.subr.mxu0 0.0
    %1044 = vmatpush1.msra.mxu0 0.0
    %1045 = vmatprep.subr.mxu0 0.0
    %1046 = vmatpush1.msra.mxu0 0.0
    %1047 = vmatprep.subr.mxu0 0.0
    %1048 = vmatpush1.msra.mxu0 0.0
    %1049 = vmatprep.subr.mxu0 0.0
    %1050 = vmatpush1.msra.mxu0 0.0
    %1051 = vmatprep.subr.mxu0 0.0
    %1052 = vmatpush1.msra.mxu0 0.0
    %1053 = vmatprep.subr.mxu0 0.0
    %1054 = vmatpush1.msra.mxu0 0.0
    %1055 = vmatprep.subr.mxu0 0.0
    %1056 = vmatpush1.msra.mxu0 0.0
    %1057 = vmatprep.subr.mxu0 0.0
    %1058 = vmatpush1.msra.mxu0 0.0
    %1059 = vmatprep.subr.mxu0 0.0
    %1060 = vmatpush1.msra.mxu0 0.0
    %1061 = vmatprep.subr.mxu0 0.0
    %1062 = vmatpush1.msra.mxu0 0.0
    %1063 = vmatprep.subr.mxu0 0.0
    %1064 = vmatpush1.msra.mxu0 0.0
    %1065 = vmatprep.subr.mxu0 0.0
    %1066 = vmatpush1.msra.mxu0 0.0
    %1067 = vmatprep.subr.mxu0 0.0
    %1068 = vmatpush1.msra.mxu0 %v1000
    %1069 = vmatprep.subr.mxu0 0.0
    %1070 = vmatpush1.msra.mxu0 %v999
    %1071 = vmatprep.subr.mxu0 0.0
    %1072 = vmatpush1.msra.mxu0 %v998
    %1073 = vmatprep.subr.mxu0 0.0
    %1074 = vmatpush1.msra.mxu0 %v997
    %1075 = vmatprep.subr.mxu0 0.0
    %1076 = vmatpush2.msra.mxu0 0.0
    %1077 = vmatprep.subr.mxu0 0.0
    %1078 = vmatpush2.msra.mxu0 0.0
    %1079 = vmatprep.subr.mxu0 0.0
    %1080 = vmatpush2.msra.mxu0 0.0
    %1081 = vmatprep.subr.mxu0 0.0
    %1082 = vmatpush2.msra.mxu0 0.0
    %1083 = vmatprep.subr.mxu0 0.0
    %1084 = vmatpush2.msra.mxu0 0.0
    %1085 = vmatprep.subr.mxu0 0.0
    %1086 = vmatpush2.msra.mxu0 0.0
    %1087 = vmatprep.subr.mxu0 0.0
    %1088 = vmatpush2.msra.mxu0 0.0
    %1089 = vmatprep.subr.mxu0 0.0
    %1090 = vmatpush2.msra.mxu0 0.0
    %1091 = vmatprep.subr.mxu0 0.0
    %1092 = vmatpush2.msra.mxu0 0.0
    %1093 = vmatprep.subr.mxu0 0.0
    %1094 = vmatpush2.msra.mxu0 0.0
    %1095 = vmatprep.subr.mxu0 0.0
    %1096 = vmatpush2.msra.mxu0 0.0
    %1097 = vmatprep.subr.mxu0 0.0
    %1098 = vmatpush2.msra.mxu0 0.0
    %1099 = vmatprep.subr.mxu0 0.0
    %1100 = vmatpush2.msra.mxu0 0.0
    %1101 = vmatprep.subr.mxu0 0.0
    %1102 = vmatpush2.msra.mxu0 0.0
    %1103 = vmatprep.subr.mxu0 0.0
    %1104 = vmatpush2.msra.mxu0 0.0
    %1105 = vmatprep.subr.mxu0 0.0
    %1106 = vmatpush2.msra.mxu0 0.0
    %1107 = vmatprep.mubr.f32.mxu0 0.0
    %1108 = vmatmul.mubr.f32.gmra.mxu0 %v1032
    %v1109 = vpop.f32.mrf.mxu0
    %v1110 = vadd.f32 %v1014, %v1109
    %v1111 = vpop.f32.mrf.mxu0
    %1112 = vmatprep.mubr.f32.mxu0 0.0
    %1113 = vmatmul.mubr.f32.gmra.mxu0 %v1035
    %v1114 = vpop.f32.mrf.mxu0
    %v1115 = vadd.f32 %v1019, %v1114
    %v1116 = vpop.f32.mrf.mxu0
    %1117 = vmatprep.mubr.f32.mxu0 0.0
    %1118 = vmatmul.mubr.f32.gmra.mxu0 %v1038
    %v1119 = vpop.f32.mrf.mxu0
    %v1120 = vadd.f32 %v1024, %v1119
    %v1121 = vpop.f32.mrf.mxu0
    %1122 = vmatprep.mubr.f32.mxu0 0.0
    %1123 = vmatmul.mubr.f32.gmra.mxu0 %v1041
    %v1124 = vpop.f32.mrf.mxu0
    %v1125 = vadd.f32 %v1029, %v1124
    %v1126 = vpop.f32.mrf.mxu0
    %1127 = vdwg.mxu0
    %v1128 = vmax.f32 %v1110, 0.0
    %v1129 = vmax.f32 %v1115, 0.0
    %v1130 = vmax.f32 %v1120, 0.0
    %v1131 = vmax.f32 %v1125, 0.0
    %s1132 = scalar_lea.vmem %s2, 224
    %v1133 = vld [vmem:[%s1132] sm:$0xff]
    %v1134 = vld [vmem:[%s1132 + $0x8] sm:$0xff]
    %v1135 = vld [vmem:[%s1132 + $0x10] sm:$0xff]
    %v1136 = vld [vmem:[%s1132 + $0x18] sm:$0xff]
    %s1137 = scalar_lea.vmem %s4, 256
    %v1138 = vld [vmem:[%s1137] sm:$0xff]
    %v1139 = vld [vmem:[%s1137 + $0x8] sm:$0xff]
    %v1140 = vld [vmem:[%s1137 + $0x10] sm:$0xff]
    %v1141 = vld [vmem:[%s1137 + $0x18] sm:$0xff]
    %1143 = vset.pattern.permute.xlu0 0
    %1144 = vperm.xlu0 %1143, %v1138
    %v1145 = vpop.permute.xlu0 %1144
    %1148 = vset.pattern.permute.xlu0 0
    %1149 = vperm.xlu0 %1148, %v1139
    %v1150 = vpop.permute.xlu0 %1149
    %1153 = vset.pattern.permute.xlu0 0
    %1154 = vperm.xlu0 %1153, %v1140
    %v1155 = vpop.permute.xlu0 %1154
    %1158 = vset.pattern.permute.xlu0 0
    %1159 = vperm.xlu0 %1158, %v1141
    %v1160 = vpop.permute.xlu0 %1159
    %v1163 = vsel %vm244, %v1133, 0
    %v1166 = vsel %vm244, %v1134, 0
    %v1169 = vsel %vm244, %v1135, 0
    %v1172 = vsel %vm244, %v1136, 0
    %1174 = vmatprep.subr.mxu0 0.0
    %1175 = vmatpush1.msra.mxu0 0.0
    %1176 = vmatprep.subr.mxu0 0.0
    %1177 = vmatpush1.msra.mxu0 0.0
    %1178 = vmatprep.subr.mxu0 0.0
    %1179 = vmatpush1.msra.mxu0 0.0
    %1180 = vmatprep.subr.mxu0 0.0
    %1181 = vmatpush1.msra.mxu0 0.0
    %1182 = vmatprep.subr.mxu0 0.0
    %1183 = vmatpush1.msra.mxu0 0.0
    %1184 = vmatprep.subr.mxu0 0.0
    %1185 = vmatpush1.msra.mxu0 0.0
    %1186 = vmatprep.subr.mxu0 0.0
    %1187 = vmatpush1.msra.mxu0 0.0
    %1188 = vmatprep.subr.mxu0 0.0
    %1189 = vmatpush1.msra.mxu0 0.0
    %1190 = vmatprep.subr.mxu0 0.0
    %1191 = vmatpush1.msra.mxu0 0.0
    %1192 = vmatprep.subr.mxu0 0.0
    %1193 = vmatpush1.msra.mxu0 0.0
    %1194 = vmatprep.subr.mxu0 0.0
    %1195 = vmatpush1.msra.mxu0 0.0
    %1196 = vmatprep.subr.mxu0 0.0
    %1197 = vmatpush1.msra.mxu0 0.0
    %1198 = vmatprep.subr.mxu0 0.0
    %1199 = vmatpush1.msra.mxu0 %v1131
    %1200 = vmatprep.subr.mxu0 0.0
    %1201 = vmatpush1.msra.mxu0 %v1130
    %1202 = vmatprep.subr.mxu0 0.0
    %1203 = vmatpush1.msra.mxu0 %v1129
    %1204 = vmatprep.subr.mxu0 0.0
    %1205 = vmatpush1.msra.mxu0 %v1128
    %1206 = vmatprep.subr.mxu0 0.0
    %1207 = vmatpush2.msra.mxu0 0.0
    %1208 = vmatprep.subr.mxu0 0.0
    %1209 = vmatpush2.msra.mxu0 0.0
    %1210 = vmatprep.subr.mxu0 0.0
    %1211 = vmatpush2.msra.mxu0 0.0
    %1212 = vmatprep.subr.mxu0 0.0
    %1213 = vmatpush2.msra.mxu0 0.0
    %1214 = vmatprep.subr.mxu0 0.0
    %1215 = vmatpush2.msra.mxu0 0.0
    %1216 = vmatprep.subr.mxu0 0.0
    %1217 = vmatpush2.msra.mxu0 0.0
    %1218 = vmatprep.subr.mxu0 0.0
    %1219 = vmatpush2.msra.mxu0 0.0
    %1220 = vmatprep.subr.mxu0 0.0
    %1221 = vmatpush2.msra.mxu0 0.0
    %1222 = vmatprep.subr.mxu0 0.0
    %1223 = vmatpush2.msra.mxu0 0.0
    %1224 = vmatprep.subr.mxu0 0.0
    %1225 = vmatpush2.msra.mxu0 0.0
    %1226 = vmatprep.subr.mxu0 0.0
    %1227 = vmatpush2.msra.mxu0 0.0
    %1228 = vmatprep.subr.mxu0 0.0
    %1229 = vmatpush2.msra.mxu0 0.0
    %1230 = vmatprep.subr.mxu0 0.0
    %1231 = vmatpush2.msra.mxu0 0.0
    %1232 = vmatprep.subr.mxu0 0.0
    %1233 = vmatpush2.msra.mxu0 0.0
    %1234 = vmatprep.subr.mxu0 0.0
    %1235 = vmatpush2.msra.mxu0 0.0
    %1236 = vmatprep.subr.mxu0 0.0
    %1237 = vmatpush2.msra.mxu0 0.0
    %1238 = vmatprep.mubr.f32.mxu0 0.0
    %1239 = vmatmul.mubr.f32.gmra.mxu0 %v1163
    %v1240 = vpop.f32.mrf.mxu0
    %v1241 = vadd.f32 %v1145, %v1240
    %v1242 = vpop.f32.mrf.mxu0
    %1243 = vmatprep.mubr.f32.mxu0 0.0
    %1244 = vmatmul.mubr.f32.gmra.mxu0 %v1166
    %v1245 = vpop.f32.mrf.mxu0
    %v1246 = vadd.f32 %v1150, %v1245
    %v1247 = vpop.f32.mrf.mxu0
    %1248 = vmatprep.mubr.f32.mxu0 0.0
    %1249 = vmatmul.mubr.f32.gmra.mxu0 %v1169
    %v1250 = vpop.f32.mrf.mxu0
    %v1251 = vadd.f32 %v1155, %v1250
    %v1252 = vpop.f32.mrf.mxu0
    %1253 = vmatprep.mubr.f32.mxu0 0.0
    %1254 = vmatmul.mubr.f32.gmra.mxu0 %v1172
    %v1255 = vpop.f32.mrf.mxu0
    %v1256 = vadd.f32 %v1160, %v1255
    %v1257 = vpop.f32.mrf.mxu0
    %1258 = vdwg.mxu0
    %v1259 = vmax.f32 %v1241, 0.0
    %v1260 = vmax.f32 %v1246, 0.0
    %v1261 = vmax.f32 %v1251, 0.0
    %v1262 = vmax.f32 %v1256, 0.0
    %v1263 = vld [vmem:[%s3] sm:$0xff]
    %v1264 = vld [vmem:[%s3 + $0x8] sm:$0xff]
    %v1265 = vld [vmem:[%s3 + $0x10] sm:$0xff]
    %v1266 = vld [vmem:[%s3 + $0x18] sm:$0xff]
    %1268 = vset.pattern.permute.xlu0 0
    %1269 = vperm.xlu0 %1268, %v1263
    %v1270 = vpop.permute.xlu0 %1269
    %1273 = vset.pattern.permute.xlu0 0
    %1274 = vperm.xlu0 %1273, %v1264
    %v1275 = vpop.permute.xlu0 %1274
    %1278 = vset.pattern.permute.xlu0 0
    %1279 = vperm.xlu0 %1278, %v1265
    %v1280 = vpop.permute.xlu0 %1279
    %1283 = vset.pattern.permute.xlu0 0
    %1284 = vperm.xlu0 %1283, %v1266
    %v1285 = vpop.permute.xlu0 %1284
    %v1287 = vmul.f32 %v1270, %v1259
    %v1288 = vmul.f32 %v1275, %v1260
    %v1289 = vmul.f32 %v1280, %v1261
    %v1290 = vmul.f32 %v1285, %v1262
    %v1291 = vadd.f32 %v1287, %v1288
    %v1292 = vadd.f32 %v1291, %v1289
    %v1293 = vadd.f32 %v1292, %v1290
    %v1294 = vrot.slane %v1293, 4
    %v1295 = vadd.f32 %v1293, %v1294
    %v1296 = vrot.slane %v1295, 2
    %v1297 = vadd.f32 %v1295, %v1296
    %v1298 = vrot.slane %v1297, 1
    %v1299 = vadd.f32 %v1297, %v1298
    %s1300 = scalar_lea.vmem %s4, 288
    %v1301 = vld [vmem:[%s1300] sm:$0xff]
    %1303 = vset.pattern.permute.xlu0 0
    %1304 = vperm.xlu0 %1303, %v1301
    %v1305 = vpop.permute.xlu0 %1304
    %v1307 = vadd.f32 %v1299, %v1305
    %v1308 = vxor.u32 %v1307, 2147483648
    %v1309 = vmul.f32 %v1308, 1.442695
    %v1310 = vpow.pop %v1309
    %v1311 = vadd.f32 %v1310, 1.0
    %v1312 = vrcp.pop %v1311
    %v1313 = vmul.f32 1.0, %v1312
    %1314 = vst [vmem:[#allocation2] sm:$0x1] %v1313
    // Predicated region
    $region22: #{tpu_custom_call.1} parent=1 // pred_check
      _
    $region23: #{tpu_custom_call.1} parent=1 // pred_check_branch
      %1316 = sbr.rel (0) target = $region25
    $region24: #{tpu_custom_call.1} parent=1 // pred_region
      %s1318 = ssub.s32 16, 16
      %1319 = vsyncadd [#allocation3], %s1318
      %s1321 = sshll.u32 [#allocation2], 4
      %s1322 = int_to_ptr.vmem [resolvable:$true] %s1321
      %1324 = dma.vmem_to_hbm [thread:$0]  %s1322, 16, %s5, [#allocation3]
    $region25: #{tpu_custom_call.1} parent=1 // pred_fallthru
      _
    // Predicated region
    $region26: #{tpu_custom_call.1} parent=1 // pred_check
      _
    $region27: #{tpu_custom_call.1} parent=1 // pred_check_branch
      %1326 = sbr.rel (0) target = $region29
    $region28: #{tpu_custom_call.1} parent=1 // pred_region
      %1327 = dma.done [#allocation3], 16
    $region29: #{tpu_custom_call.1} parent=1 // pred_fallthru
      _
    %1328 = vsyncpa [#allocation3], 1

</llo_original>
